<compile_context>
chip_gen: v5e
topology: v5e:2x2
jax: 0.10.0
libtpu: 0.0.40
codegen_flags: <defaults>
</compile_context>

<pallas_src>
import math

import jax
import jax.numpy as jnp
from jax.experimental import pallas as pl
from jax.experimental.pallas import tpu as pltpu


# ----------------------------------------------------------------------------
# factorization() ported verbatim from lycoris/lokr.py (pure integer math)
# ----------------------------------------------------------------------------
def factorization(dimension: int, factor: int = -1):
    if factor > 0 and dimension % factor == 0:
        m = factor
        n = dimension // factor
        return m, n
    if factor == -1:
        factor = dimension
    m, n = 1, dimension
    length = m + n
    while m < n:
        new_m = m + 1
        while dimension % new_m != 0:
            new_m += 1
        new_n = dimension // new_m
        if new_m + new_n > length or new_m > factor:
            break
        else:
            m, n = new_m, new_n
    if m > n:
        n, m = m, n
    return m, n


def _round_up(x, m):
    return ((x + m - 1) // m) * m


def _pick_tile(dim, align, max_tile):
    """Largest tile <= max_tile that divides dim and is a multiple of align, else full dim."""
    if dim <= max_tile:
        return dim
    t = (max_tile // align) * align
    while t >= align:
        if dim % t == 0:
            return t
        t -= align
    return dim


def _tile_caps_and_vmem():
    """Per-generation (tm, tn, tk) caps + explicit scoped-VMEM limit (bytes)."""
    try:
        kind = jax.devices()[0].device_kind.lower()
    except Exception:
        kind = ""
    if "v6" in kind:
        # 128 MiB physical VMEM: larger K blocks cut grid-step overhead and get the
        # weight stream closer to the HBM roofline.
        return 512, 512, 1024, 96 * 1024 * 1024
    if "v5" in kind:
        # v5e scoped default is only 16 MiB; the f32 delta intermediates are invisible
        # to the BlockSpec estimate, so raise the limit explicitly.
        return 512, 512, 512, 64 * 1024 * 1024
    # v7x (64 MiB physical VMEM) and unknown chips: conservative.
    return 512, 512, 512, 48 * 1024 * 1024


# ----------------------------------------------------------------------------
# Fused kernel:  y = x @ (W_org + D).T + bias
#   grid = (M tiles, N tiles, K tiles), K (reduction) innermost
#   per (n,k) weight tile:  D_tile = (P1_tile @ E_tile) * (T_tile @ P2_tile)
#   (scale is pre-folded into P1 in the wrapper)
# ----------------------------------------------------------------------------
def _make_lokr_linear_kernel(has_bias):
    def body(x_ref, w_ref, p1_ref, p2_ref, e_ref, t_ref, b_ref, o_ref, acc_ref):
        k = pl.program_id(2)

        @pl.when(k == 0)
        def _init():
            acc_ref[...] = jnp.zeros_like(acc_ref)

        # LoKr delta tile (TN, TK):  D[o, c] = P1[o, c//in_n] * P2[o % out_k, c]
        # E / T are 0/1 selection matrices, so these tiny matmuls are exact gathers
        # executed on the MXU (vex slot), leaving the VPU to the merge/accumulate.
        # TODO(synk): if a bundle dump shows these MXU pushes contending with the
        #             main GEMM, replace them with lane/sublane broadcast gathers.
        p1e = jnp.dot(p1_ref[...], e_ref[...], preferred_element_type=jnp.float32)
        p2e = jnp.dot(t_ref[...], p2_ref[...], preferred_element_type=jnp.float32)
        # Delta built in f32, rounded once to the weight dtype, added in the native
        # dtype (no full-tile f32 round-trip of org_weight).
        w_tile = w_ref[...] + (p1e * p2e).astype(w_ref.dtype)

        # x (TM, TK) contracted with w_tile (TN, TK) over K -> (TM, TN), f32 accum.
        acc_ref[...] += jax.lax.dot_general(
            x_ref[...], w_tile,
            dimension_numbers=(((1,), (1,)), ((), ())),
            preferred_element_type=jnp.float32,
        )

        @pl.when(k == pl.num_programs(2) - 1)
        def _finalize():
            acc = acc_ref[...]
            if has_bias:
                acc = acc + b_ref[...].astype(jnp.float32)
            o_ref[...] = acc.astype(o_ref.dtype)

    if has_bias:
        return body

    def body_nobias(x_ref, w_ref, p1_ref, p2_ref, e_ref, t_ref, o_ref, acc_ref):
        return body(x_ref, w_ref, p1_ref, p2_ref, e_ref, t_ref, None, o_ref, acc_ref)

    return body_nobias


# ----------------------------------------------------------------------------
# LoKr forward (Linear org_module, cp=False)
# ----------------------------------------------------------------------------
def lokr_linear_forward(x, org_weight, org_bias, w1, w2a, w2b,
                        *, lora_dim, alpha, multiplier, factor=-1):
    out_dim, in_dim = org_weight.shape
    in_m, in_n = factorization(in_dim, factor)
    out_l, out_k = factorization(out_dim, factor)
    assert w1.shape == (out_l, out_k)
    assert w2a.shape == (in_m, lora_dim)
    assert w2b.shape == (lora_dim, in_n)
    batch = x.shape[0]

    # Keep x and org_weight in the same dtype (no-op if they already match).
    org_weight = org_weight.astype(x.dtype)

    scale = (float(alpha) / float(lora_dim)) * float(multiplier)
    f32 = jnp.float32

    # ---- tiny parameter prep (pure-JAX glue, O(out*(in_m+out_k) + out_k*in)) ----
    # kron(w1, w2).reshape(out, in) satisfies, with s = (o % out_k)*in_m + c//in_n:
    #   D[o, c] = w1[o//out_k, s % out_k] * w2[s//out_k, c % in_n]
    #           = P1[o, c//in_n] * P2[o % out_k, c]
    w2 = jnp.dot(w2a.astype(f32), w2b.astype(f32))                      # (in_m, in_n)
    s = jnp.arange(out_k)[:, None] * in_m + jnp.arange(in_m)[None, :]   # (out_k, in_m)
    # scale folded into P1 -> no per-tile scale multiply inside the kernel.
    p1 = (w1.astype(f32) * scale)[:, s % out_k].reshape(out_dim, in_m)  # (out, in_m)
    p2 = w2[s // out_k, :].reshape(out_k, in_dim)                       # (out_k, in)

    # Pad the tiny contraction dims up to multiples of 8 (zero rows/cols -> exact).
    in_m_p = _round_up(in_m, 8)
    out_k_p = _round_up(out_k, 8)
    p1 = jnp.pad(p1, ((0, 0), (0, in_m_p - in_m)))
    p2 = jnp.pad(p2, ((0, out_k_p - out_k), (0, 0)))

    # 0/1 expansion matrices.  Both are GLOBAL and indexed by the k / n grid axes,
    # so tk / tn need no in_n / out_k alignment.
    e_mat = (jnp.arange(in_dim)[None, :] // in_n
             == jnp.arange(in_m_p)[:, None]).astype(f32)                # (in_m_p, in)
    t_mat = (jnp.arange(out_dim)[:, None] % out_k
             == jnp.arange(out_k_p)[None, :]).astype(f32)               # (out, out_k_p)

    # ---- tiling ----
    tm_cap, tn_cap, tk_cap, vmem_limit = _tile_caps_and_vmem()
    tm = _pick_tile(batch, 8, tm_cap)
    tn = _pick_tile(out_dim, 128, tn_cap)
    tk = _pick_tile(in_dim, 128, tk_cap)
    # Guarantee >=2 parallel (M, N) tiles so both TensorCores on v7x get work even
    # for single-M-tile (small batch) shapes; negligible cost on single-TC chips.
    if (batch // tm) * (out_dim // tn) < 2 and out_dim >= 256:
        tn_half = _pick_tile(out_dim, 128, max(tn // 2, 128))
        if out_dim // tn_half >= 2:
            tn = tn_half

    has_bias = org_bias is not None
    operands = [x, org_weight, p1, p2, e_mat, t_mat]
    in_specs = [
        pl.BlockSpec((tm, tk), lambda m, n, k: (m, k)),          # x
        pl.BlockSpec((tn, tk), lambda m, n, k: (n, k)),          # org weight
        pl.BlockSpec((tn, in_m_p), lambda m, n, k: (n, 0)),      # P1 (scale folded in)
        pl.BlockSpec((out_k_p, tk), lambda m, n, k: (0, k)),     # P2
        pl.BlockSpec((in_m_p, tk), lambda m, n, k: (0, k)),      # E  (global, by k)
        pl.BlockSpec((tn, out_k_p), lambda m, n, k: (n, 0)),     # T  (global, by n)
    ]
    if has_bias:
        operands.append(org_bias.reshape(1, out_dim).astype(f32))
        in_specs.append(pl.BlockSpec((1, tn), lambda m, n, k: (0, n)))

    grid = (batch // tm, out_dim // tn, in_dim // tk)

    cost = pl.CostEstimate(
        flops=2 * batch * out_dim * in_dim,
        transcendentals=0,
        bytes_accessed=(x.size * x.dtype.itemsize
                        + org_weight.size * org_weight.dtype.itemsize
                        + batch * out_dim * x.dtype.itemsize),
    )

    y = pl.pallas_call(
        _make_lokr_linear_kernel(has_bias),
        out_shape=jax.ShapeDtypeStruct((batch, out_dim), x.dtype),
        grid_spec=pltpu.PrefetchScalarGridSpec(
            num_scalar_prefetch=0,
            grid=grid,
            in_specs=in_specs,
            out_specs=pl.BlockSpec((tm, tn), lambda m, n, k: (m, n)),
            scratch_shapes=[pltpu.VMEM((tm, tn), jnp.float32)],
        ),
        compiler_params=pltpu.CompilerParams(
            dimension_semantics=("parallel", "parallel", "arbitrary"),
            vmem_limit_bytes=vmem_limit),
        cost_estimate=cost,
    )(*operands)
    return y


if __name__ == "__main__":
    def make_inputs(key, B, IN, OUT, R):
        in_m, in_n = factorization(IN)
        out_l, out_k = factorization(OUT)
        ks = jax.random.split(key, 6)
        x = jax.random.normal(ks[0], (B, IN), jnp.float32)
        org_weight = jax.random.normal(ks[1], (OUT, IN), jnp.float32) * 0.05
        org_bias = jax.random.normal(ks[2], (OUT,), jnp.float32) * 0.1
        # NOTE: the PyTorch module inits lokr_w2_a to zeros (delta == 0); use non-zero
        # values here so the LoKr delta path is actually exercised and validated.
        w1 = jax.random.normal(ks[3], (out_l, out_k), jnp.float32)
        w2a = jax.random.normal(ks[4], (in_m, R), jnp.float32) * 0.3
        w2b = jax.random.normal(ks[5], (R, in_n), jnp.float32) * 0.3
        return x, org_weight, org_bias, w1, w2a, w2b

    def reference(x, org_weight, org_bias, w1, w2a, w2b, R, alpha, multiplier):
        # pure-JAX mirror of LokrModule.forward (make_weight + F.linear)
        scale = (alpha / R) * multiplier
        kron = jnp.kron(w1, w2a @ w2b)
        merged = (org_weight.reshape(kron.shape) + kron * scale).reshape(org_weight.shape)
        y = x @ merged.T
        if org_bias is not None:
            y = y + org_bias
        return y

    ALPHA, MULT, R = 1.0, 1.0, 4
    key = jax.random.PRNGKey(0)
    k1, k2 = jax.random.split(key)

    # --- Test 1: nn.Linear(64 -> 80) with bias; in_m == in_n == 8, out = (8, 10) ---
    B, IN, OUT = 8, 64, 80
    x, w, b, w1, w2a, w2b = make_inputs(k1, B, IN, OUT, R)
    y = jax.block_until_ready(lokr_linear_forward(
        x, w, b, w1, w2a, w2b, lora_dim=R, alpha=ALPHA, multiplier=MULT))
    y_ref = reference(x, w, b, w1, w2a, w2b, R, ALPHA, MULT)
    assert y.shape == (B, OUT)
    assert jnp.allclose(y, y_ref, atol=1e-3, rtol=1e-3), "mismatch (bias, 64->80)"

    # --- Test 2: same layer, bias=None (nn.Linear(bias=False)) -> no-bias kernel ---
    y_nb = jax.block_until_ready(lokr_linear_forward(
        x, w, None, w1, w2a, w2b, lora_dim=R, alpha=ALPHA, multiplier=MULT))
    y_nb_ref = reference(x, w, None, w1, w2a, w2b, R, ALPHA, MULT)
    assert jnp.allclose(y_nb, y_nb_ref, atol=1e-3, rtol=1e-3), "mismatch (no bias)"

    # --- Test 3: nn.Linear(96 -> 120); in_m != in_n = (8, 12), out = (10, 12) ------
    # Exercises the non-trivial kron->weight reshape scramble.
    B2, IN2, OUT2 = 16, 96, 120
    x2, w2_, b2, w1b, w2ab, w2bb = make_inputs(k2, B2, IN2, OUT2, R)
    y2 = jax.block_until_ready(lokr_linear_forward(
        x2, w2_, b2, w1b, w2ab, w2bb, lora_dim=R, alpha=ALPHA, multiplier=MULT))
    y2_ref = reference(x2, w2_, b2, w1b, w2ab, w2bb, R, ALPHA, MULT)
    assert jnp.allclose(y2, y2_ref, atol=2e-3, rtol=2e-3), "mismatch (bias, 96->120)"

    # --- Test 4: bf16 activations / org_weight (delta applied at bf16 precision) ---
    x2_bf = x2.astype(jnp.bfloat16)
    w2_bf = w2_.astype(jnp.bfloat16)
    y2_bf = jax.block_until_ready(lokr_linear_forward(
        x2_bf, w2_bf, b2, w1b, w2ab, w2bb, lora_dim=R, alpha=ALPHA, multiplier=MULT))
    y2_bf_ref = reference(x2_bf.astype(jnp.float32), w2_bf.astype(jnp.float32),
                          b2, w1b, w2ab, w2bb, R, ALPHA, MULT)
    assert y2_bf.dtype == jnp.bfloat16
    assert jnp.allclose(y2_bf.astype(jnp.float32), y2_bf_ref, atol=5e-2, rtol=5e-2), \
        "mismatch (bf16, 96->120)"

    print("KERNEL_OK")
</pallas_src>

<mosaic_0001>
module attributes {stable_mosaic.version = 11 : i64} {
  func.func @body(%arg0: i32, %arg1: i32, %arg2: i32, %arg3: memref<8x64xf32, #tpu.memory_space<vmem>>, %arg4: memref<80x64xf32, #tpu.memory_space<vmem>>, %arg5: memref<80x8xf32, #tpu.memory_space<vmem>>, %arg6: memref<16x64xf32, #tpu.memory_space<vmem>>, %arg7: memref<8x64xf32, #tpu.memory_space<vmem>>, %arg8: memref<80x16xf32, #tpu.memory_space<vmem>>, %arg9: memref<1x80xf32, #tpu.memory_space<vmem>>, %arg10: memref<8x80xf32, #tpu.memory_space<vmem>>, %arg11: memref<8x80xf32, #tpu.memory_space<vmem>>) attributes {dimension_semantics = [#tpu.dimension_semantics<parallel>, #tpu.dimension_semantics<parallel>, #tpu.dimension_semantics<arbitrary>], iteration_bounds = array<i64: 1, 1, 1>, scalar_prefetch = 0 : i64, scratch_operands = 1 : i64, tpu.core_type = #tpu.core_type<tc>, window_params = [{transform_indices = @transform_0, window_bounds = array<i64: 8, 64>}, {transform_indices = @transform_1, window_bounds = array<i64: 80, 64>}, {transform_indices = @transform_2, window_bounds = array<i64: 80, 8>}, {transform_indices = @transform_3, window_bounds = array<i64: 16, 64>}, {transform_indices = @transform_4, window_bounds = array<i64: 8, 64>}, {transform_indices = @transform_5, window_bounds = array<i64: 80, 16>}, {transform_indices = @transform_6, window_bounds = array<i64: 1, 80>}, {transform_indices = @transform_7, window_bounds = array<i64: 8, 80>}]} {
    %c0_i32 = arith.constant 0 : i32
    %0 = arith.cmpi eq, %arg2, %c0_i32 : i32
    %1 = arith.extui %0 : i1 to i32
    %c0_i32_0 = arith.constant 0 : i32
    %2 = arith.cmpi ne, %1, %c0_i32_0 : i32
    scf.if %2 {
      %cst_20 = arith.constant 0.000000e+00 : f32
      %20 = vector.broadcast %cst_20 : f32 to vector<8x80xf32>
      %c0_21 = arith.constant 0 : index
      %c0_22 = arith.constant 0 : index
      %21 = vector.load %arg11[%c0_21, %c0_22] : memref<8x80xf32, #tpu.memory_space<vmem>>, vector<8x80xf32>
      tpu.vector_store %arg11[%c0_21, %c0_22], %20 {strides = array<i32>} : memref<8x80xf32, #tpu.memory_space<vmem>>, vector<8x80xf32>,
    } else {
    }
    %c0 = arith.constant 0 : index
    %c0_1 = arith.constant 0 : index
    %3 = vector.load %arg5[%c0, %c0_1] : memref<80x8xf32, #tpu.memory_space<vmem>>, vector<80x8xf32>
    %c0_2 = arith.constant 0 : index
    %c0_3 = arith.constant 0 : index
    %4 = vector.load %arg7[%c0_2, %c0_3] : memref<8x64xf32, #tpu.memory_space<vmem>>, vector<8x64xf32>
    %cst = arith.constant dense<0.000000e+00> : vector<80x64xf32>
    %5 = tpu.matmul %3, %4, %cst {dimension_numbers = #tpu.dot_dimension_numbers<[1], [0], [0], [1], [0, 0, 1, 1], [], []>} : vector<80x8xf32>, vector<8x64xf32>, vector<80x64xf32> -> vector<80x64xf32>
    %c0_4 = arith.constant 0 : index
    %c0_5 = arith.constant 0 : index
    %6 = vector.load %arg8[%c0_4, %c0_5] : memref<80x16xf32, #tpu.memory_space<vmem>>, vector<80x16xf32>
    %c0_6 = arith.constant 0 : index
    %c0_7 = arith.constant 0 : index
    %7 = vector.load %arg6[%c0_6, %c0_7] : memref<16x64xf32, #tpu.memory_space<vmem>>, vector<16x64xf32>
    %cst_8 = arith.constant dense<0.000000e+00> : vector<80x64xf32>
    %8 = tpu.matmul %6, %7, %cst_8 {dimension_numbers = #tpu.dot_dimension_numbers<[1], [0], [0], [1], [0, 0, 1, 1], [], []>} : vector<80x16xf32>, vector<16x64xf32>, vector<80x64xf32> -> vector<80x64xf32>
    %c0_9 = arith.constant 0 : index
    %c0_10 = arith.constant 0 : index
    %9 = vector.load %arg4[%c0_9, %c0_10] : memref<80x64xf32, #tpu.memory_space<vmem>>, vector<80x64xf32>
    %10 = arith.mulf %5, %8 : vector<80x64xf32>
    %11 = arith.addf %9, %10 : vector<80x64xf32>
    %c0_11 = arith.constant 0 : index
    %c0_12 = arith.constant 0 : index
    %12 = vector.load %arg11[%c0_11, %c0_12] : memref<8x80xf32, #tpu.memory_space<vmem>>, vector<8x80xf32>
    %c0_13 = arith.constant 0 : index
    %c0_14 = arith.constant 0 : index
    %13 = vector.load %arg3[%c0_13, %c0_14] : memref<8x64xf32, #tpu.memory_space<vmem>>, vector<8x64xf32>
    %cst_15 = arith.constant dense<0.000000e+00> : vector<8x80xf32>
    %14 = tpu.matmul %13, %11, %cst_15 {dimension_numbers = #tpu.dot_dimension_numbers<[1], [1], [0], [0], [0, 0, 1, 0], [], []>} : vector<8x64xf32>, vector<80x64xf32>, vector<8x80xf32> -> vector<8x80xf32>
    %15 = arith.addf %12, %14 : vector<8x80xf32>
    %c0_16 = arith.constant 0 : index
    %c0_17 = arith.constant 0 : index
    %16 = vector.load %arg11[%c0_16, %c0_17] : memref<8x80xf32, #tpu.memory_space<vmem>>, vector<8x80xf32>
    tpu.vector_store %arg11[%c0_16, %c0_17], %15 {strides = array<i32>} : memref<8x80xf32, #tpu.memory_space<vmem>>, vector<8x80xf32>,
    %c0_i32_18 = arith.constant 0 : i32
    %17 = arith.cmpi eq, %arg2, %c0_i32_18 : i32
    %18 = arith.extui %17 : i1 to i32
    %c0_i32_19 = arith.constant 0 : i32
    %19 = arith.cmpi ne, %18, %c0_i32_19 : i32
    scf.if %19 {
      %c0_20 = arith.constant 0 : index
      %c0_21 = arith.constant 0 : index
      %20 = vector.load %arg11[%c0_20, %c0_21] : memref<8x80xf32, #tpu.memory_space<vmem>>, vector<8x80xf32>
      %c0_22 = arith.constant 0 : index
      %c0_23 = arith.constant 0 : index
      %21 = vector.load %arg9[%c0_22, %c0_23] : memref<1x80xf32, #tpu.memory_space<vmem>>, vector<1x80xf32>
      %22 = vector.broadcast %21 : vector<1x80xf32> to vector<8x80xf32>
      %23 = arith.addf %20, %22 : vector<8x80xf32>
      %c0_24 = arith.constant 0 : index
      %c0_25 = arith.constant 0 : index
      %24 = vector.load %arg10[%c0_24, %c0_25] : memref<8x80xf32, #tpu.memory_space<vmem>>, vector<8x80xf32>
      tpu.vector_store %arg10[%c0_24, %c0_25], %23 {strides = array<i32>} : memref<8x80xf32, #tpu.memory_space<vmem>>, vector<8x80xf32>,
    } else {
    }
    return
  }
  func.func @transform_0(%arg0: i32, %arg1: i32, %arg2: i32) -> (i32, i32) {
    %c0_i32 = arith.constant 0 : i32
    return %arg0, %arg2 : i32, i32
  }
  func.func @transform_1(%arg0: i32, %arg1: i32, %arg2: i32) -> (i32, i32) {
    %c0_i32 = arith.constant 0 : i32
    return %arg1, %arg2 : i32, i32
  }
  func.func @transform_2(%arg0: i32, %arg1: i32, %arg2: i32) -> (i32, i32) {
    %c0_i32 = arith.constant 0 : i32
    %c0_i32_0 = arith.constant 0 : i32
    return %arg1, %c0_i32 : i32, i32
  }
  func.func @transform_3(%arg0: i32, %arg1: i32, %arg2: i32) -> (i32, i32) {
    %c0_i32 = arith.constant 0 : i32
    %c0_i32_0 = arith.constant 0 : i32
    return %c0_i32, %arg2 : i32, i32
  }
  func.func @transform_4(%arg0: i32, %arg1: i32, %arg2: i32) -> (i32, i32) {
    %c0_i32 = arith.constant 0 : i32
    %c0_i32_0 = arith.constant 0 : i32
    return %c0_i32, %arg2 : i32, i32
  }
  func.func @transform_5(%arg0: i32, %arg1: i32, %arg2: i32) -> (i32, i32) {
    %c0_i32 = arith.constant 0 : i32
    %c0_i32_0 = arith.constant 0 : i32
    return %arg1, %c0_i32 : i32, i32
  }
  func.func @transform_6(%arg0: i32, %arg1: i32, %arg2: i32) -> (i32, i32) {
    %c0_i32 = arith.constant 0 : i32
    %c0_i32_0 = arith.constant 0 : i32
    return %c0_i32, %arg1 : i32, i32
  }
  func.func @transform_7(%arg0: i32, %arg1: i32, %arg2: i32) -> (i32, i32) {
    %c0_i32 = arith.constant 0 : i32
    return %arg0, %arg1 : i32, i32
  }
}

</mosaic_0001>

<llo_original>
// kernel: tpu_custom_call.1
$region0: #{tpu_custom_call.1}
  #allocation0 [shape = 'u32[]', space=smem, size = 0x4, offset = 0x4, fixed_abs, tag = 'smem constant byte address 0x4 - core index']
  #allocation1 [shape = 'u32[72,128]{1,0:T(1,128)}', space=vmem, size = 0x9000, scoped, tag = 'internal scratch']
  #allocation2 [shape = 'f32[8,80]{1,0:T(8,128)}', space=vmem, size = 0x1000, scoped, tag = 'scratch operand']
  %s0 = inlined_call_operand.vmem [shape: f32[8,64], index: 0, kind: input, shape index: {}]
  %s1 = inlined_call_operand.vmem [shape: f32[80,64], index: 1, kind: input, shape index: {}]
  %s2 = inlined_call_operand.vmem [shape: f32[80,8], index: 2, kind: input, shape index: {}]
  %s3 = inlined_call_operand.vmem [shape: f32[16,64], index: 3, kind: input, shape index: {}]
  %s4 = inlined_call_operand.vmem [shape: f32[8,64], index: 4, kind: input, shape index: {}]
  %s5 = inlined_call_operand.vmem [shape: f32[80,16], index: 5, kind: input, shape index: {}]
  %s6 = inlined_call_operand.vmem [shape: f32[1,80], index: 6, kind: input, shape index: {}]
  %s7 = inlined_call_operand.hbm [shape: f32[8,80], index: 7, kind: output, shape index: {}]
  %s8 = sld [smem:[#allocation0]]
  $region46: #{tpu_custom_call.1} parent=0
    _
  %s10 = ssub.s32 1, %s8
  %s11 = scalar_select 0, %s10, %s8
  $region1: #{tpu_custom_call.1} parent=0
    #allocation3 [shape = 'u8[4096]{0}', space=vmem, size = 0x1000, scoped, tag = 'output window, operand 0, single buffered']
    #allocation4 [shape = 's32[1]{0}', space=sflag, size = 0x4, scoped, tag = 'scoped memory for tpu_custom_call.1']
    %12 = vsyncpa [#allocation4], 0
    // Predicated region
    $region2: #{tpu_custom_call.1} parent=1 // pred_check
      _
    $region3: #{tpu_custom_call.1} parent=1 // pred_check_branch
      %14 = sbr.rel (0) target = $region5
    $region4: #{tpu_custom_call.1} parent=1 // pred_region
      _
    $region5: #{tpu_custom_call.1} parent=1 // pred_fallthru
      _
    // Predicated region
    $region6: #{tpu_custom_call.1} parent=1 // pred_check
      _
    $region7: #{tpu_custom_call.1} parent=1 // pred_check_branch
      %16 = sbr.rel (0) target = $region9
    $region8: #{tpu_custom_call.1} parent=1 // pred_region
      _
    $region9: #{tpu_custom_call.1} parent=1 // pred_fallthru
      _
    // Predicated region
    $region10: #{tpu_custom_call.1} parent=1 // pred_check
      _
    $region11: #{tpu_custom_call.1} parent=1 // pred_check_branch
      %18 = sbr.rel (0) target = $region13
    $region12: #{tpu_custom_call.1} parent=1 // pred_region
      _
    $region13: #{tpu_custom_call.1} parent=1 // pred_fallthru
      _
    // Predicated region
    $region14: #{tpu_custom_call.1} parent=1 // pred_check
      _
    $region15: #{tpu_custom_call.1} parent=1 // pred_check_branch
      %20 = sbr.rel (0) target = $region17
    $region16: #{tpu_custom_call.1} parent=1 // pred_region
      _
    $region17: #{tpu_custom_call.1} parent=1 // pred_fallthru
      _
    // Predicated region
    $region18: #{tpu_custom_call.1} parent=1 // pred_check
      _
    $region19: #{tpu_custom_call.1} parent=1 // pred_check_branch
      %22 = sbr.rel (0) target = $region21
    $region20: #{tpu_custom_call.1} parent=1 // pred_region
      _
    $region21: #{tpu_custom_call.1} parent=1 // pred_fallthru
      _
    // Predicated region
    $region22: #{tpu_custom_call.1} parent=1 // pred_check
      _
    $region23: #{tpu_custom_call.1} parent=1 // pred_check_branch
      %24 = sbr.rel (0) target = $region25
    $region24: #{tpu_custom_call.1} parent=1 // pred_region
      _
    $region25: #{tpu_custom_call.1} parent=1 // pred_fallthru
      _
    // Predicated region
    $region26: #{tpu_custom_call.1} parent=1 // pred_check
      _
    $region27: #{tpu_custom_call.1} parent=1 // pred_check_branch
      %26 = sbr.rel (0) target = $region29
    $region28: #{tpu_custom_call.1} parent=1 // pred_region
      _
    $region29: #{tpu_custom_call.1} parent=1 // pred_fallthru
      _
    %p27 = scmp.eq.s32.totalorder 0, 0
    // Predicated region
    $region30: #{tpu_custom_call.1} parent=1 // pred_check
      %p28 = pneg %p27
    $region31: #{tpu_custom_call.1} parent=1 // pred_check_branch
      %30 = sbr.rel (%p28) target = $region33
    $region32: #{tpu_custom_call.1} parent=1 // pred_region
      %vm31 = vcmask 654336
      %32 = vst.msk [vmem:[#allocation2] sm:$0xff] %vm31, 0.0
    $region33: #{tpu_custom_call.1} parent=1 // pred_fallthru
      _
    %v33 = vld [vmem:[%s2] sm:$0xff]
    %v34 = vld [vmem:[%s2 + $0x8] sm:$0xff]
    %v35 = vld [vmem:[%s2 + $0x10] sm:$0xff]
    %v36 = vld [vmem:[%s2 + $0x18] sm:$0xff]
    %v37 = vld [vmem:[%s2 + $0x20] sm:$0xff]
    %v38 = vld [vmem:[%s2 + $0x28] sm:$0xff]
    %v39 = vld [vmem:[%s2 + $0x30] sm:$0xff]
    %v40 = vld [vmem:[%s2 + $0x38] sm:$0xff]
    %v41 = vld [vmem:[%s2 + $0x40] sm:$0xff]
    %v42 = vld [vmem:[%s2 + $0x48] sm:$0xff]
    %v43 = vld [vmem:[%s4] sm:$0xff]
    %vm44 = vcmask 64512
    %v46 = vsel %vm44, %v33, 0
    %v49 = vsel %vm44, %v34, 0
    %v52 = vsel %vm44, %v35, 0
    %v55 = vsel %vm44, %v36, 0
    %v58 = vsel %vm44, %v37, 0
    %v61 = vsel %vm44, %v38, 0
    %v64 = vsel %vm44, %v39, 0
    %v67 = vsel %vm44, %v40, 0
    %v70 = vsel %vm44, %v41, 0
    %v73 = vsel %vm44, %v42, 0
    %75 = vmatpush.msra.mxu0 0.0
    %76 = vmatpush.msra.mxu0 0.0
    %77 = vmatpush.msra.mxu0 0.0
    %78 = vmatpush.msra.mxu0 0.0
    %79 = vmatpush.msra.mxu0 0.0
    %80 = vmatpush.msra.mxu0 0.0
    %81 = vmatpush.msra.mxu0 0.0
    %82 = vmatpush.msra.mxu0 0.0
    %83 = vmatpush.msra.mxu0 0.0
    %84 = vmatpush.msra.mxu0 0.0
    %85 = vmatpush.msra.mxu0 0.0
    %86 = vmatpush.msra.mxu0 0.0
    %87 = vmatpush.msra.mxu0 0.0
    %88 = vmatpush.msra.mxu0 0.0
    %89 = vmatpush.msra.mxu0 0.0
    %90 = vmatpush.msra.mxu0 %v43
    %91 = vmatmul.f32.gmra.mxu0 %v46
    %v92 = vpop.f32.mrf.mxu0
    %v93 = vadd.f32 0.0, %v92
    %94 = vmatmul.f32.gmra.mxu0 %v49
    %v95 = vpop.f32.mrf.mxu0
    %v96 = vadd.f32 0.0, %v95
    %97 = vmatmul.f32.gmra.mxu0 %v52
    %v98 = vpop.f32.mrf.mxu0
    %v99 = vadd.f32 0.0, %v98
    %100 = vmatmul.f32.gmra.mxu0 %v55
    %v101 = vpop.f32.mrf.mxu0
    %v102 = vadd.f32 0.0, %v101
    %103 = vmatmul.f32.gmra.mxu0 %v58
    %v104 = vpop.f32.mrf.mxu0
    %v105 = vadd.f32 0.0, %v104
    %106 = vmatmul.f32.gmra.mxu0 %v61
    %v107 = vpop.f32.mrf.mxu0
    %v108 = vadd.f32 0.0, %v107
    %109 = vmatmul.f32.gmra.mxu0 %v64
    %v110 = vpop.f32.mrf.mxu0
    %v111 = vadd.f32 0.0, %v110
    %112 = vmatmul.f32.gmra.mxu0 %v67
    %v113 = vpop.f32.mrf.mxu0
    %v114 = vadd.f32 0.0, %v113
    %115 = vmatmul.f32.gmra.mxu0 %v70
    %v116 = vpop.f32.mrf.mxu0
    %v117 = vadd.f32 0.0, %v116
    %118 = vmatmul.f32.gmra.mxu0 %v73
    %v119 = vpop.f32.mrf.mxu0
    %v120 = vadd.f32 0.0, %v119
    %121 = vdwg.mxu0
    %v122 = vld [vmem:[%s5] sm:$0xff]
    %v123 = vld [vmem:[%s5 + $0x8] sm:$0xff]
    %v124 = vld [vmem:[%s5 + $0x10] sm:$0xff]
    %v125 = vld [vmem:[%s5 + $0x18] sm:$0xff]
    %v126 = vld [vmem:[%s5 + $0x20] sm:$0xff]
    %v127 = vld [vmem:[%s5 + $0x28] sm:$0xff]
    %v128 = vld [vmem:[%s5 + $0x30] sm:$0xff]
    %v129 = vld [vmem:[%s5 + $0x38] sm:$0xff]
    %v130 = vld [vmem:[%s5 + $0x40] sm:$0xff]
    %v131 = vld [vmem:[%s5 + $0x48] sm:$0xff]
    %v132 = vld [vmem:[%s3] sm:$0xff]
    %v133 = vld [vmem:[%s3 + $0x8] sm:$0xff]
    %vm134 = vcmask 130048
    %v136 = vsel %vm134, %v122, 0
    %v139 = vsel %vm134, %v123, 0
    %v142 = vsel %vm134, %v124, 0
    %v145 = vsel %vm134, %v125, 0
    %v148 = vsel %vm134, %v126, 0
    %v151 = vsel %vm134, %v127, 0
    %v154 = vsel %vm134, %v128, 0
    %v157 = vsel %vm134, %v129, 0
    %v160 = vsel %vm134, %v130, 0
    %v163 = vsel %vm134, %v131, 0
    %165 = vmatpush.msra.mxu0 0.0
    %166 = vmatpush.msra.mxu0 0.0
    %167 = vmatpush.msra.mxu0 0.0
    %168 = vmatpush.msra.mxu0 0.0
    %169 = vmatpush.msra.mxu0 0.0
    %170 = vmatpush.msra.mxu0 0.0
    %171 = vmatpush.msra.mxu0 0.0
    %172 = vmatpush.msra.mxu0 0.0
    %173 = vmatpush.msra.mxu0 0.0
    %174 = vmatpush.msra.mxu0 0.0
    %175 = vmatpush.msra.mxu0 0.0
    %176 = vmatpush.msra.mxu0 0.0
    %177 = vmatpush.msra.mxu0 0.0
    %178 = vmatpush.msra.mxu0 0.0
    %179 = vmatpush.msra.mxu0 %v133
    %180 = vmatpush.msra.mxu0 %v132
    %181 = vmatmul.f32.gmra.mxu0 %v136
    %v182 = vpop.f32.mrf.mxu0
    %v183 = vadd.f32 0.0, %v182
    %184 = vmatmul.f32.gmra.mxu0 %v139
    %v185 = vpop.f32.mrf.mxu0
    %v186 = vadd.f32 0.0, %v185
    %187 = vmatmul.f32.gmra.mxu0 %v142
    %v188 = vpop.f32.mrf.mxu0
    %v189 = vadd.f32 0.0, %v188
    %190 = vmatmul.f32.gmra.mxu0 %v145
    %v191 = vpop.f32.mrf.mxu0
    %v192 = vadd.f32 0.0, %v191
    %193 = vmatmul.f32.gmra.mxu0 %v148
    %v194 = vpop.f32.mrf.mxu0
    %v195 = vadd.f32 0.0, %v194
    %196 = vmatmul.f32.gmra.mxu0 %v151
    %v197 = vpop.f32.mrf.mxu0
    %v198 = vadd.f32 0.0, %v197
    %199 = vmatmul.f32.gmra.mxu0 %v154
    %v200 = vpop.f32.mrf.mxu0
    %v201 = vadd.f32 0.0, %v200
    %202 = vmatmul.f32.gmra.mxu0 %v157
    %v203 = vpop.f32.mrf.mxu0
    %v204 = vadd.f32 0.0, %v203
    %205 = vmatmul.f32.gmra.mxu0 %v160
    %v206 = vpop.f32.mrf.mxu0
    %v207 = vadd.f32 0.0, %v206
    %208 = vmatmul.f32.gmra.mxu0 %v163
    %v209 = vpop.f32.mrf.mxu0
    %v210 = vadd.f32 0.0, %v209
    %211 = vdwg.mxu0
    %v212 = vld [vmem:[%s1] sm:$0xff]
    %v213 = vld [vmem:[%s1 + $0x8] sm:$0xff]
    %v214 = vld [vmem:[%s1 + $0x10] sm:$0xff]
    %v215 = vld [vmem:[%s1 + $0x18] sm:$0xff]
    %v216 = vld [vmem:[%s1 + $0x20] sm:$0xff]
    %v217 = vld [vmem:[%s1 + $0x28] sm:$0xff]
    %v218 = vld [vmem:[%s1 + $0x30] sm:$0xff]
    %v219 = vld [vmem:[%s1 + $0x38] sm:$0xff]
    %v220 = vld [vmem:[%s1 + $0x40] sm:$0xff]
    %v221 = vld [vmem:[%s1 + $0x48] sm:$0xff]
    %v222 = vmul.f32 %v93, %v183
    %v223 = vmul.f32 %v96, %v186
    %v224 = vmul.f32 %v99, %v189
    %v225 = vmul.f32 %v102, %v192
    %v226 = vmul.f32 %v105, %v195
    %v227 = vmul.f32 %v108, %v198
    %v228 = vmul.f32 %v111, %v201
    %v229 = vmul.f32 %v114, %v204
    %v230 = vmul.f32 %v117, %v207
    %v231 = vmul.f32 %v120, %v210
    %v232 = vadd.f32 %v212, %v222
    %v233 = vadd.f32 %v213, %v223
    %v234 = vadd.f32 %v214, %v224
    %v235 = vadd.f32 %v215, %v225
    %v236 = vadd.f32 %v216, %v226
    %v237 = vadd.f32 %v217, %v227
    %v238 = vadd.f32 %v218, %v228
    %v239 = vadd.f32 %v219, %v229
    %v240 = vadd.f32 %v220, %v230
    %v241 = vadd.f32 %v221, %v231
    %v242 = vld [vmem:[#allocation2] sm:$0xff]
    %v243 = vld [vmem:[%s0] sm:$0xff]
    %vm244 = vcmask 523264
    %v246 = vsel %vm244, %v243, 0
    %v249 = vsel %vm244, %v232, 0
    %v252 = vsel %vm244, %v233, 0
    %v255 = vsel %vm244, %v234, 0
    %v258 = vsel %vm244, %v235, 0
    %v261 = vsel %vm244, %v236, 0
    %v264 = vsel %vm244, %v237, 0
    %v267 = vsel %vm244, %v238, 0
    %v270 = vsel %vm244, %v239, 0
    %v273 = vsel %vm244, %v240, 0
    %v276 = vsel %vm244, %v241, 0
    %278 = vmatpush.xpose.msra.mxu0 0.0
    %279 = vmatpush.xpose.msra.mxu0 0.0
    %280 = vmatpush.xpose.msra.mxu0 0.0
    %281 = vmatpush.xpose.msra.mxu0 0.0
    %282 = vmatpush.xpose.msra.mxu0 0.0
    %283 = vmatpush.xpose.msra.mxu0 0.0
    %284 = vmatpush.xpose.msra.mxu0 %v276
    %285 = vmatpush.xpose.msra.mxu0 %v273
    %286 = vmatpush.xpose.msra.mxu0 %v270
    %287 = vmatpush.xpose.msra.mxu0 %v267
    %288 = vmatpush.xpose.msra.mxu0 %v264
    %289 = vmatpush.xpose.msra.mxu0 %v261
    %290 = vmatpush.xpose.msra.mxu0 %v258
    %291 = vmatpush.xpose.msra.mxu0 %v255
    %292 = vmatpush.xpose.msra.mxu0 %v252
    %293 = vmatpush.xpose.msra.mxu0 %v249
    %294 = vmatmul.f32.gmra.mxu0 %v246
    %v295 = vpop.f32.mrf.mxu0
    %v296 = vadd.f32 0.0, %v295
    %297 = vdwg.mxu0
    %v298 = vadd.f32 %v242, %v296
    %vm299 = vcmask 654336
    %300 = vst.msk [vmem:[#allocation2] sm:$0xff] %vm299, %v298
    // Predicated region
    $region34: #{tpu_custom_call.1} parent=1 // pred_check
      %p301 = pneg %p27
    $region35: #{tpu_custom_call.1} parent=1 // pred_check_branch
      %303 = sbr.rel (%p301) target = $region37
    $region36: #{tpu_custom_call.1} parent=1 // pred_region
      %v304 = vld [vmem:[#allocation2] sm:$0xff]
      %v305 = vld [vmem:[%s6] sm:$0x1]
      %v307 = vperm.slane %v305, 0
      %v309 = vadd.f32 %v304, %v307
      %310 = vst.msk [vmem:[#allocation3] sm:$0xff] %vm299, %v309
    $region37: #{tpu_custom_call.1} parent=1 // pred_fallthru
      _
    // Predicated region
    $region38: #{tpu_custom_call.1} parent=1 // pred_check
      _
    $region39: #{tpu_custom_call.1} parent=1 // pred_check_branch
      %312 = sbr.rel (0) target = $region41
    $region40: #{tpu_custom_call.1} parent=1 // pred_region
      %314 = vsyncadd [#allocation4], 0
      %s316 = sshll.u32 [#allocation3], 4
      %s317 = int_to_ptr.vmem [resolvable:$true] %s316
      %s318 = sshll.u32 %s7, 4
      %s319 = int_to_ptr.hbm [resolvable:$true] %s318
      %321 = dma.vmem_to_hbm [thread:$0]  %s317, 128, %s319, [#allocation4]
    $region41: #{tpu_custom_call.1} parent=1 // pred_fallthru
      _
    // Predicated region
    $region42: #{tpu_custom_call.1} parent=1 // pred_check
      _
    $region43: #{tpu_custom_call.1} parent=1 // pred_check_branch
      %323 = sbr.rel (0) target = $region45
    $region44: #{tpu_custom_call.1} parent=1 // pred_region
      %325 = dma.done [#allocation4], 128
    $region45: #{tpu_custom_call.1} parent=1 // pred_fallthru
      _
    %326 = vsyncpa [#allocation4], 1

</llo_original>
